<compile_context>
chip_gen: v6e
topology: v6e:2x2x1
jax: 0.10.0
libtpu: 0.0.40
codegen_flags: <defaults>
</compile_context>

<pallas_src>
import functools

import jax
import jax.numpy as jnp
from jax.experimental import pallas as pl
from jax.experimental.pallas import tpu as pltpu

_SUB_F32 = 8       # f32 sublane tile
_SUB_BF16 = 16     # bf16 sublane tile
_LANE = 128        # lane tile
_MAX_ROWS_TILE = 1024   # 1024 rows * 128 lanes * 4 comps * 4 B = 2 MiB / input block


def _num_tensorcores():
    """Best-effort TensorCore-per-chip count (1 on v5e/v6e, 2 on v7x)."""
    try:
        info = pltpu.get_tpu_info()
        for name in ("num_cores", "tensorcores_per_chip",
                     "tensor_cores_per_chip", "cores_per_chip"):
            v = getattr(info, name, None)
            if isinstance(v, int) and v > 0:
                return v
    except Exception:
        pass
    try:
        if "v7" in jax.devices()[0].device_kind.lower():
            return 2
    except Exception:
        pass
    return 1


def _compute_loss(p_ref, t_ref, loss_type):
    """Per-box loss on lane/sublane-dense (rows_tile, 128) component tiles."""
    f32 = jnp.float32
    p_x = p_ref[0].astype(f32)
    p_y = p_ref[1].astype(f32)
    p_w = p_ref[2].astype(f32)
    p_h = p_ref[3].astype(f32)
    t_x = t_ref[0].astype(f32)
    t_y = t_ref[1].astype(f32)
    t_w = t_ref[2].astype(f32)
    t_h = t_ref[3].astype(f32)

    p_hw, p_hh = p_w * 0.5, p_h * 0.5
    t_hw, t_hh = t_w * 0.5, t_h * 0.5

    tl_x = jnp.maximum(p_x - p_hw, t_x - t_hw)
    tl_y = jnp.maximum(p_y - p_hh, t_y - t_hh)
    br_x = jnp.minimum(p_x + p_hw, t_x + t_hw)
    br_y = jnp.minimum(p_y + p_hh, t_y + t_hh)

    area_p = p_w * p_h
    area_g = t_w * t_h

    en = jnp.logical_and(tl_x < br_x, tl_y < br_y).astype(f32)
    area_i = (br_x - tl_x) * (br_y - tl_y) * en
    area_u = area_p + area_g - area_i
    iou = area_i / (area_u + 1e-16)

    if loss_type == 'iou':
        loss = 1.0 - iou * iou
    else:  # 'giou'
        c_tl_x = jnp.minimum(p_x - p_hw, t_x - t_hw)
        c_tl_y = jnp.minimum(p_y - p_hh, t_y - t_hh)
        c_br_x = jnp.maximum(p_x + p_hw, t_x + t_hw)
        c_br_y = jnp.maximum(p_y + p_hh, t_y + t_hh)
        area_c = (c_br_x - c_tl_x) * (c_br_y - c_tl_y)
        giou = iou - (area_c - area_u) / jnp.maximum(area_c, 1e-16)
        loss = 1.0 - jnp.clip(giou, -1.0, 1.0)
    return loss


def _iou_loss_map_kernel(p_ref, t_ref, o_ref, *, loss_type):
    # reduction='none': dense (rows_tile, 128) lane-dense output block.
    # Padded tail boxes (loss == 1) are sliced away in the wrapper.
    o_ref[...] = _compute_loss(p_ref, t_ref, loss_type)


def _iou_loss_sum_kernel(p_ref, t_ref, o_ref, *, loss_type, n_boxes, rows_tile):
    # reduction='mean'/'sum': accumulate masked partial sums into a single
    # (8, 128) output block that stays resident across the (arbitrary) grid.
    @pl.when(pl.program_id(0) == 0)
    def _init():
        o_ref[...] = jnp.zeros_like(o_ref)

    loss = _compute_loss(p_ref, t_ref, loss_type)

    row0 = pl.program_id(0) * rows_tile
    rows = jax.lax.broadcasted_iota(jnp.int32, loss.shape, 0) + row0
    lanes = jax.lax.broadcasted_iota(jnp.int32, loss.shape, 1)
    valid = (rows * _LANE + lanes) < n_boxes          # mask padded tail boxes
    loss = jnp.where(valid, loss, 0.0)

    # (rows_tile, 128) -> (rows_tile//8, 8, 128): pure vreg-wise adds (VALU).
    o_ref[...] += jnp.sum(loss.reshape(-1, _SUB_F32, _LANE), axis=0)


def iou_loss(pred, target, *, reduction='none', loss_type='iou', rows_tile=None):
    """Pallas equivalent of IOUloss.forward(pred, target)."""
    if loss_type not in ('iou', 'giou'):
        raise ValueError(f"unknown loss_type {loss_type}")
    if reduction not in ('none', 'mean', 'sum'):
        raise ValueError(f"unknown reduction {reduction}")
    assert pred.shape[0] == target.shape[0]

    # Keep bf16 inputs in bf16 for the DMA (upcast to f32 inside the kernel);
    # everything else is handled as f32.
    both_bf16 = (pred.dtype == jnp.bfloat16 and target.dtype == jnp.bfloat16)
    in_dtype = jnp.bfloat16 if both_bf16 else jnp.float32
    pred = jnp.reshape(pred, (-1, 4)).astype(in_dtype)
    target = jnp.reshape(target, (-1, 4)).astype(in_dtype)
    n = pred.shape[0]

    sub = _SUB_BF16 if in_dtype == jnp.bfloat16 else _SUB_F32
    rows = pl.cdiv(n, _LANE)            # each row of 128 lanes holds 128 boxes

    if rows_tile is None:
        cores = _num_tensorcores()
        # >= 2 blocks per TensorCore on multi-core chips (v7x) so double
        # buffering overlaps DMA with compute; single block otherwise (v5e/v6e
        # run the grid serially, extra steps only add overhead).
        min_blocks = 1 if cores <= 1 else 2 * cores
        blocks = max(min_blocks, pl.cdiv(rows, _MAX_ROWS_TILE))
        rows_tile = pl.cdiv(pl.cdiv(rows, blocks), sub) * sub
        rows_tile = max(min(rows_tile, _MAX_ROWS_TILE), sub)
    else:
        rows_tile = max(pl.cdiv(rows_tile, sub) * sub, sub)

    rows_pad = pl.cdiv(rows, rows_tile) * rows_tile
    n_pad = rows_pad * _LANE
    grid = (rows_pad // rows_tile,)

    def to_slab(x):
        # Single fused pad + transpose + reshape pass per input producing
        # component-major, vreg-dense (4, rows_pad, 128) slabs.
        x = jnp.pad(x, ((0, n_pad - n), (0, 0)))
        return jnp.reshape(x.T, (4, rows_pad, _LANE))

    p = to_slab(pred)
    t = to_slab(target)

    in_specs = [pl.BlockSpec((4, rows_tile, _LANE), lambda i: (0, i, 0)),
                pl.BlockSpec((4, rows_tile, _LANE), lambda i: (0, i, 0))]

    if reduction == 'none':
        out = pl.pallas_call(
            functools.partial(_iou_loss_map_kernel, loss_type=loss_type),
            out_shape=jax.ShapeDtypeStruct((rows_pad, _LANE), jnp.float32),
            grid_spec=pl.GridSpec(
                grid=grid,
                in_specs=in_specs,
                out_specs=pl.BlockSpec((rows_tile, _LANE), lambda i: (i, 0)),
            ),
            compiler_params=pltpu.CompilerParams(
                dimension_semantics=("parallel",),
                allow_input_fusion=[True, True],
            ),
        )(p, t)
        return jnp.reshape(out, (-1,))[:n]     # drop padded tail boxes

    out = pl.pallas_call(
        functools.partial(_iou_loss_sum_kernel, loss_type=loss_type,
                          n_boxes=n, rows_tile=rows_tile),
        out_shape=jax.ShapeDtypeStruct((_SUB_F32, _LANE), jnp.float32),
        grid_spec=pl.GridSpec(
            grid=grid,
            in_specs=in_specs,
            out_specs=pl.BlockSpec((_SUB_F32, _LANE), lambda i: (0, 0)),
        ),
        compiler_params=pltpu.CompilerParams(
            dimension_semantics=("arbitrary",),     # single revisited out block
            allow_input_fusion=[True, True],
        ),
    )(p, t)
    total = jnp.sum(out)                  # tiny (8,128) final reduce
    if reduction == 'mean':
        total = total / n
    return total


def _iou_loss_ref(pred, target, *, reduction='none', loss_type='iou'):
    """Pure-JAX reference mirroring the PyTorch forward, for verification."""
    pred = jnp.reshape(pred, (-1, 4)).astype(jnp.float32)
    target = jnp.reshape(target, (-1, 4)).astype(jnp.float32)
    tl = jnp.maximum(pred[:, :2] - pred[:, 2:] / 2, target[:, :2] - target[:, 2:] / 2)
    br = jnp.minimum(pred[:, :2] + pred[:, 2:] / 2, target[:, :2] + target[:, 2:] / 2)
    area_p = jnp.prod(pred[:, 2:], axis=1)
    area_g = jnp.prod(target[:, 2:], axis=1)
    en = jnp.prod((tl < br).astype(tl.dtype), axis=1)
    area_i = jnp.prod(br - tl, axis=1) * en
    area_u = area_p + area_g - area_i
    iou = area_i / (area_u + 1e-16)
    if loss_type == 'iou':
        loss = 1 - iou ** 2
    elif loss_type == 'giou':
        c_tl = jnp.minimum(pred[:, :2] - pred[:, 2:] / 2, target[:, :2] - target[:, 2:] / 2)
        c_br = jnp.maximum(pred[:, :2] + pred[:, 2:] / 2, target[:, :2] + target[:, 2:] / 2)
        area_c = jnp.prod(c_br - c_tl, axis=1)
        giou = iou - (area_c - area_u) / jnp.maximum(area_c, 1e-16)
        loss = 1 - jnp.clip(giou, -1.0, 1.0)
    if reduction == 'mean':
        loss = jnp.mean(loss)
    elif reduction == 'sum':
        loss = jnp.sum(loss)
    return loss


if __name__ == "__main__":
    key = jax.random.PRNGKey(0)

    def make_boxes(k, shape):
        k1, k2 = jax.random.split(k)
        xy = jax.random.uniform(k1, shape[:-1] + (2,), minval=0.0, maxval=16.0)
        wh = jax.random.uniform(k2, shape[:-1] + (2,), minval=0.5, maxval=8.0)
        return jnp.concatenate([xy, wh], axis=-1)

    k1, k2, k3, k4 = jax.random.split(key, 4)
    # Small: (B=2, A=32, 4) -> viewed as (-1, 4); single-block path.
    pred_a, tgt_a = make_boxes(k1, (2, 32, 4)), make_boxes(k2, (2, 32, 4))
    # Larger: (3000, 4) with rows_tile=8 override -> 3-block grid, exercises
    # multi-block pipelining, accumulator init/accumulate and tail masking.
    pred_b, tgt_b = make_boxes(k3, (3000, 4)), make_boxes(k4, (3000, 4))
    # bf16 inputs: exercises bf16 DMA + in-kernel upcast path.
    pred_c, tgt_c = pred_a.astype(jnp.bfloat16), tgt_a.astype(jnp.bfloat16)

    cases = (
        (pred_a, tgt_a, None),
        (pred_b, tgt_b, 8),
        (pred_c, tgt_c, None),
    )

    ok = True
    for pred, target, tile in cases:
        for loss_type in ('iou', 'giou'):
            for reduction in ('none', 'mean', 'sum'):
                got = iou_loss(pred, target, reduction=reduction,
                               loss_type=loss_type, rows_tile=tile)
                got = jax.block_until_ready(got)
                want = _iou_loss_ref(pred, target, reduction=reduction,
                                     loss_type=loss_type)
                if not jnp.allclose(got, want, atol=1e-5, rtol=1e-5):
                    ok = False
                    print(f"MISMATCH shape={pred.shape} dtype={pred.dtype} "
                          f"loss_type={loss_type} reduction={reduction}")

    if ok:
        print("KERNEL_OK")
</pallas_src>

<mosaic_0001>
module attributes {stable_mosaic.version = 11 : i64} {
  func.func @_iou_loss_map_kernel(%arg0: i32, %arg1: memref<4x8x128xf32, #tpu.memory_space<vmem>>, %arg2: memref<4x8x128xf32, #tpu.memory_space<vmem>>, %arg3: memref<8x128xf32, #tpu.memory_space<vmem>>) attributes {dimension_semantics = [#tpu.dimension_semantics<parallel>], iteration_bounds = array<i64: 1>, scalar_prefetch = 0 : i64, scratch_operands = 0 : i64, tpu.core_type = #tpu.core_type<tc>, window_params = [{transform_indices = @transform_0, window_bounds = array<i64: 4, 8, 128>}, {transform_indices = @transform_1, window_bounds = array<i64: 4, 8, 128>}, {transform_indices = @transform_2, window_bounds = array<i64: 8, 128>}]} {
    %c0 = arith.constant 0 : index
    %c0_0 = arith.constant 0 : index
    %c0_1 = arith.constant 0 : index
    %0 = vector.load %arg1[%c0, %c0_0, %c0_1] : memref<4x8x128xf32, #tpu.memory_space<vmem>>, vector<1x8x128xf32>
    %1 = vector.shape_cast %0 : vector<1x8x128xf32> to vector<8x128xf32>
    %c1 = arith.constant 1 : index
    %c0_2 = arith.constant 0 : index
    %c0_3 = arith.constant 0 : index
    %2 = vector.load %arg1[%c1, %c0_2, %c0_3] : memref<4x8x128xf32, #tpu.memory_space<vmem>>, vector<1x8x128xf32>
    %3 = vector.shape_cast %2 : vector<1x8x128xf32> to vector<8x128xf32>
    %c2 = arith.constant 2 : index
    %c0_4 = arith.constant 0 : index
    %c0_5 = arith.constant 0 : index
    %4 = vector.load %arg1[%c2, %c0_4, %c0_5] : memref<4x8x128xf32, #tpu.memory_space<vmem>>, vector<1x8x128xf32>
    %5 = vector.shape_cast %4 : vector<1x8x128xf32> to vector<8x128xf32>
    %c3 = arith.constant 3 : index
    %c0_6 = arith.constant 0 : index
    %c0_7 = arith.constant 0 : index
    %6 = vector.load %arg1[%c3, %c0_6, %c0_7] : memref<4x8x128xf32, #tpu.memory_space<vmem>>, vector<1x8x128xf32>
    %7 = vector.shape_cast %6 : vector<1x8x128xf32> to vector<8x128xf32>
    %c0_8 = arith.constant 0 : index
    %c0_9 = arith.constant 0 : index
    %c0_10 = arith.constant 0 : index
    %8 = vector.load %arg2[%c0_8, %c0_9, %c0_10] : memref<4x8x128xf32, #tpu.memory_space<vmem>>, vector<1x8x128xf32>
    %9 = vector.shape_cast %8 : vector<1x8x128xf32> to vector<8x128xf32>
    %c1_11 = arith.constant 1 : index
    %c0_12 = arith.constant 0 : index
    %c0_13 = arith.constant 0 : index
    %10 = vector.load %arg2[%c1_11, %c0_12, %c0_13] : memref<4x8x128xf32, #tpu.memory_space<vmem>>, vector<1x8x128xf32>
    %11 = vector.shape_cast %10 : vector<1x8x128xf32> to vector<8x128xf32>
    %c2_14 = arith.constant 2 : index
    %c0_15 = arith.constant 0 : index
    %c0_16 = arith.constant 0 : index
    %12 = vector.load %arg2[%c2_14, %c0_15, %c0_16] : memref<4x8x128xf32, #tpu.memory_space<vmem>>, vector<1x8x128xf32>
    %13 = vector.shape_cast %12 : vector<1x8x128xf32> to vector<8x128xf32>
    %c3_17 = arith.constant 3 : index
    %c0_18 = arith.constant 0 : index
    %c0_19 = arith.constant 0 : index
    %14 = vector.load %arg2[%c3_17, %c0_18, %c0_19] : memref<4x8x128xf32, #tpu.memory_space<vmem>>, vector<1x8x128xf32>
    %15 = vector.shape_cast %14 : vector<1x8x128xf32> to vector<8x128xf32>
    %cst = arith.constant 5.000000e-01 : f32
    %16 = vector.broadcast %cst : f32 to vector<8x128xf32>
    %17 = arith.mulf %5, %16 : vector<8x128xf32>
    %cst_20 = arith.constant 5.000000e-01 : f32
    %18 = vector.broadcast %cst_20 : f32 to vector<8x128xf32>
    %19 = arith.mulf %7, %18 : vector<8x128xf32>
    %cst_21 = arith.constant 5.000000e-01 : f32
    %20 = vector.broadcast %cst_21 : f32 to vector<8x128xf32>
    %21 = arith.mulf %13, %20 : vector<8x128xf32>
    %cst_22 = arith.constant 5.000000e-01 : f32
    %22 = vector.broadcast %cst_22 : f32 to vector<8x128xf32>
    %23 = arith.mulf %15, %22 : vector<8x128xf32>
    %24 = arith.subf %1, %17 : vector<8x128xf32>
    %25 = arith.subf %9, %21 : vector<8x128xf32>
    %26 = arith.maximumf %24, %25 : vector<8x128xf32>
    %27 = arith.subf %3, %19 : vector<8x128xf32>
    %28 = arith.subf %11, %23 : vector<8x128xf32>
    %29 = arith.maximumf %27, %28 : vector<8x128xf32>
    %30 = arith.addf %1, %17 : vector<8x128xf32>
    %31 = arith.addf %9, %21 : vector<8x128xf32>
    %32 = arith.minimumf %30, %31 : vector<8x128xf32>
    %33 = arith.addf %3, %19 : vector<8x128xf32>
    %34 = arith.addf %11, %23 : vector<8x128xf32>
    %35 = arith.minimumf %33, %34 : vector<8x128xf32>
    %36 = arith.mulf %5, %7 : vector<8x128xf32>
    %37 = arith.mulf %13, %15 : vector<8x128xf32>
    %38 = arith.cmpf olt, %26, %32 : vector<8x128xf32>
    %39 = arith.cmpf olt, %29, %35 : vector<8x128xf32>
    %40 = arith.andi %38, %39 : vector<8x128xi1>
    %41 = arith.extui %40 : vector<8x128xi1> to vector<8x128xi32>
    %42 = arith.sitofp %41 : vector<8x128xi32> to vector<8x128xf32>
    %43 = arith.subf %32, %26 : vector<8x128xf32>
    %44 = arith.subf %35, %29 : vector<8x128xf32>
    %45 = arith.mulf %43, %44 : vector<8x128xf32>
    %46 = arith.mulf %45, %42 : vector<8x128xf32>
    %47 = arith.addf %36, %37 : vector<8x128xf32>
    %48 = arith.subf %47, %46 : vector<8x128xf32>
    %cst_23 = arith.constant 1.000000e-16 : f32
    %49 = vector.broadcast %cst_23 : f32 to vector<8x128xf32>
    %50 = arith.addf %48, %49 : vector<8x128xf32>
    %51 = arith.divf %46, %50 : vector<8x128xf32>
    %52 = arith.mulf %51, %51 : vector<8x128xf32>
    %cst_24 = arith.constant 1.000000e+00 : f32
    %53 = vector.broadcast %cst_24 : f32 to vector<8x128xf32>
    %54 = arith.subf %53, %52 : vector<8x128xf32>
    %c0_25 = arith.constant 0 : index
    %c0_26 = arith.constant 0 : index
    %55 = vector.load %arg3[%c0_25, %c0_26] : memref<8x128xf32, #tpu.memory_space<vmem>>, vector<8x128xf32>
    tpu.vector_store %arg3[%c0_25, %c0_26], %54 {strides = array<i32>} : memref<8x128xf32, #tpu.memory_space<vmem>>, vector<8x128xf32>,
    return
  }
  func.func @transform_0(%arg0: i32) -> (i32, i32, i32) {
    %c0_i32 = arith.constant 0 : i32
    %c0_i32_0 = arith.constant 0 : i32
    %c0_i32_1 = arith.constant 0 : i32
    return %c0_i32, %arg0, %c0_i32_0 : i32, i32, i32
  }
  func.func @transform_1(%arg0: i32) -> (i32, i32, i32) {
    %c0_i32 = arith.constant 0 : i32
    %c0_i32_0 = arith.constant 0 : i32
    %c0_i32_1 = arith.constant 0 : i32
    return %c0_i32, %arg0, %c0_i32_0 : i32, i32, i32
  }
  func.func @transform_2(%arg0: i32) -> (i32, i32) {
    %c0_i32 = arith.constant 0 : i32
    %c0_i32_0 = arith.constant 0 : i32
    return %arg0, %c0_i32 : i32, i32
  }
}

</mosaic_0001>

<llo_original>
// kernel: tpu_custom_call.1
$region0: #{tpu_custom_call.1}
  #allocation0 [shape = 'u32[]', space=smem, size = 0x4, offset = 0x4, fixed_abs, tag = 'smem constant byte address 0x4 - core index']
  #allocation1 [shape = 'u32[144,128]{1,0:T(1,128)}', space=vmem, size = 0x12000, scoped, tag = 'internal scratch']
  %s0 = inlined_call_operand.hbm [shape: f32[4,8,128], index: 0, kind: input, shape index: {}]
  %s1 = inlined_call_operand.hbm [shape: f32[4,8,128], index: 1, kind: input, shape index: {}]
  %s2 = inlined_call_operand.hbm [shape: f32[8,128], index: 2, kind: output, shape index: {}]
  %s3 = sld [smem:[#allocation0]]
  $region26: #{tpu_custom_call.1} parent=0
    _
  %s5 = ssub.s32 1, %s3
  %s6 = scalar_select 0, %s5, %s3
  $region1: #{tpu_custom_call.1} parent=0
    #allocation2 [shape = 'u8[16384]{0}', space=vmem, size = 0x4000, scoped, tag = 'input window, operand 0, single buffered']
    #allocation3 [shape = 's32[1]{0}', space=sflag, size = 0x4, scoped, tag = 'scoped memory for tpu_custom_call.1']
    #allocation4 [shape = 's32[1]{0}', space=sflag, size = 0x4, scoped, tag = 'scoped memory for tpu_custom_call.1']
    #allocation5 [shape = 'u8[16384]{0}', space=vmem, size = 0x4000, scoped, tag = 'input window, operand 1, single buffered']
    #allocation6 [shape = 's32[1]{0}', space=sflag, size = 0x4, scoped, tag = 'scoped memory for tpu_custom_call.1']
    #allocation7 [shape = 'u8[4096]{0}', space=vmem, size = 0x1000, scoped, tag = 'output window, operand 0, single buffered']
    %7 = vsyncpa [#allocation3], 0
    %8 = vsyncpa [#allocation6], 0
    %9 = vsyncpa [#allocation4], 0
    // Predicated region
    $region2: #{tpu_custom_call.1} parent=1 // pred_check
      _
    $region3: #{tpu_custom_call.1} parent=1 // pred_check_branch
      %11 = sbr.rel (0) target = $region5
    $region4: #{tpu_custom_call.1} parent=1 // pred_region
      %s13 = ssub.s32 512, 512
      %14 = vsyncadd [#allocation3], %s13
      %s15 = sshll.u32 [#allocation2], 4
      %s16 = int_to_ptr.vmem [resolvable:$true] %s15
      %21 = dma.hbm_to_vmem [thread:$0]  %s0, 512, %s16, [#allocation3], 128, 128, 8
    $region5: #{tpu_custom_call.1} parent=1 // pred_fallthru
      _
    // Predicated region
    $region6: #{tpu_custom_call.1} parent=1 // pred_check
      _
    $region7: #{tpu_custom_call.1} parent=1 // pred_check_branch
      %23 = sbr.rel (0) target = $region9
    $region8: #{tpu_custom_call.1} parent=1 // pred_region
      %s25 = ssub.s32 512, 512
      %26 = vsyncadd [#allocation6], %s25
      %s27 = sshll.u32 [#allocation5], 4
      %s28 = int_to_ptr.vmem [resolvable:$true] %s27
      %33 = dma.hbm_to_vmem [thread:$0]  %s1, 512, %s28, [#allocation6], 128, 128, 8
    $region9: #{tpu_custom_call.1} parent=1 // pred_fallthru
      _
    // Predicated region
    $region10: #{tpu_custom_call.1} parent=1 // pred_check
      _
    $region11: #{tpu_custom_call.1} parent=1 // pred_check_branch
      %35 = sbr.rel (0) target = $region13
    $region12: #{tpu_custom_call.1} parent=1 // pred_region
      %36 = dma.done [#allocation3], 512
    $region13: #{tpu_custom_call.1} parent=1 // pred_fallthru
      _
    // Predicated region
    $region14: #{tpu_custom_call.1} parent=1 // pred_check
      _
    $region15: #{tpu_custom_call.1} parent=1 // pred_check_branch
      %38 = sbr.rel (0) target = $region17
    $region16: #{tpu_custom_call.1} parent=1 // pred_region
      %39 = dma.done [#allocation6], 512
    $region17: #{tpu_custom_call.1} parent=1 // pred_fallthru
      _
    %v40 = vld [vmem:[#allocation2] sm:$0xff]
    %s41 = scalar_lea.vmem [#allocation2], 8
    %v42 = vld [vmem:[%s41] sm:$0xff]
    %s43 = scalar_lea.vmem [#allocation2], 16
    %v44 = vld [vmem:[%s43] sm:$0xff]
    %s45 = scalar_lea.vmem [#allocation2], 24
    %v46 = vld [vmem:[%s45] sm:$0xff]
    %v47 = vld [vmem:[#allocation5] sm:$0xff]
    %s48 = scalar_lea.vmem [#allocation5], 8
    %v49 = vld [vmem:[%s48] sm:$0xff]
    %s50 = scalar_lea.vmem [#allocation5], 16
    %v51 = vld [vmem:[%s50] sm:$0xff]
    %s52 = scalar_lea.vmem [#allocation5], 24
    %v53 = vld [vmem:[%s52] sm:$0xff]
    %v54 = vmul.f32 %v44, 0.5
    %v55 = vmul.f32 %v46, 0.5
    %v56 = vmul.f32 %v51, 0.5
    %v57 = vmul.f32 %v53, 0.5
    %v58 = vsub.f32 %v40, %v54
    %v59 = vsub.f32 %v47, %v56
    %v60 = vmax.f32 %v58, %v59
    %v61 = vsub.f32 %v42, %v55
    %v62 = vsub.f32 %v49, %v57
    %v63 = vmax.f32 %v61, %v62
    %v64 = vadd.f32 %v40, %v54
    %v65 = vadd.f32 %v47, %v56
    %v66 = vmin.f32 %v64, %v65
    %v67 = vadd.f32 %v42, %v55
    %v68 = vadd.f32 %v49, %v57
    %v69 = vmin.f32 %v67, %v68
    %v70 = vmul.f32 %v44, %v46
    %v71 = vmul.f32 %v51, %v53
    %vm72 = vcmp.lt.f32.partialorder %v60, %v66
    %vm73 = vcmp.lt.f32.partialorder %v63, %v69
    %vm74 = vmand %vm72, %vm73
    %v75 = vsel %vm74, 1, 0
    %v76 = vcvt.s32.f32 %v75
    %v77 = vsub.f32 %v66, %v60
    %v78 = vsub.f32 %v69, %v63
    %v79 = vmul.f32 %v77, %v78
    %v80 = vmul.f32 %v79, %v76
    %v81 = vadd.f32 %v70, %v71
    %v82 = vsub.f32 %v81, %v80
    %v83 = vadd.f32 %v82, 1e-16
    %v84 = vrcp.pop %v83
    %v85 = vmul.f32 %v80, %v84
    %v86 = vmul.f32 %v85, %v85
    %v87 = vsub.f32 1.0, %v86
    %88 = vst [vmem:[#allocation7] sm:$0xff] %v87
    // Predicated region
    $region18: #{tpu_custom_call.1} parent=1 // pred_check
      _
    $region19: #{tpu_custom_call.1} parent=1 // pred_check_branch
      %90 = sbr.rel (0) target = $region21
    $region20: #{tpu_custom_call.1} parent=1 // pred_region
      %s92 = ssub.s32 128, 128
      %93 = vsyncadd [#allocation4], %s92
      %s95 = sshll.u32 [#allocation7], 4
      %s96 = int_to_ptr.vmem [resolvable:$true] %s95
      %98 = dma.vmem_to_hbm [thread:$0]  %s96, 128, %s2, [#allocation4]
    $region21: #{tpu_custom_call.1} parent=1 // pred_fallthru
      _
    // Predicated region
    $region22: #{tpu_custom_call.1} parent=1 // pred_check
      _
    $region23: #{tpu_custom_call.1} parent=1 // pred_check_branch
      %100 = sbr.rel (0) target = $region25
    $region24: #{tpu_custom_call.1} parent=1 // pred_region
      %101 = dma.done [#allocation4], 128
    $region25: #{tpu_custom_call.1} parent=1 // pred_fallthru
      _
    %102 = vsyncpa [#allocation3], 1
    %103 = vsyncpa [#allocation6], 1
    %104 = vsyncpa [#allocation4], 1

</llo_original>
